<compile_context>
chip_gen: v7x
topology: tpu7x:2x2x1
jax: 0.10.0
libtpu: 0.0.40
codegen_flags: <defaults>
</compile_context>

<pallas_src>
import jax
import jax.numpy as jnp
from jax.experimental import pallas as pl
from jax.experimental.pallas import tpu as pltpu

HIDDEN_PAD = 128   # hidden (64) and action (2) dims padded to one full lane tile
TM_MAX = 512       # batch-tile rows per grid step for large batches


def _round_up(n, m):
    return ((n + m - 1) // m) * m


def dqn_kernel(x_ref, w1_ref, w23_ref, b_ref, o_ref):
    """Fused l1 -> relu -> l2 -> relu -> l3 on one (TM, D) batch tile.

    x_ref  : (TM, D)        f32   activation tile (marches over batch)
    w1_ref : (D, 128)       bf16  layer-1 weight (in, out), hidden zero-padded
    w23_ref: (2, 128, 128)  bf16  stacked layer-2 / layer-3 weights
    b_ref  : (3, 128)       f32   packed biases (b1, b2, b3), zero-padded
    o_ref  : (TM, 128)      f32   lane-dense output; Q-values in [:, :action_dim]
    """
    x = x_ref[...].astype(jnp.bfloat16)

    # layer 1 (K = state_dim): bf16 MXU matmul, f32 accumulate, f32 bias + ReLU.
    h1 = jnp.dot(x, w1_ref[...], preferred_element_type=jnp.float32)
    h1 = jnp.maximum(h1 + b_ref[0:1, :], 0.0).astype(jnp.bfloat16)

    # layer 2
    h2 = jnp.dot(h1, w23_ref[0], preferred_element_type=jnp.float32)
    h2 = jnp.maximum(h2 + b_ref[1:2, :], 0.0).astype(jnp.bfloat16)

    # layer 3: full 128-wide MXU result tile, unmasked lane-dense store.
    out = jnp.dot(h2, w23_ref[1], preferred_element_type=jnp.float32) + b_ref[2:3, :]
    o_ref[...] = out.astype(o_ref.dtype)


def dqn_forward(x, packed):
    """x: (B, state_dim) float32.  packed: output of pack_params()."""
    w1, w23, b = packed["w1"], packed["w23"], packed["b"]
    action_dim = packed["action_dim"]
    B, D = x.shape
    H = w1.shape[1]  # 128

    # Batch tiling: tiny batches -> one padded step; big batches -> 512-row tiles.
    TM = TM_MAX if B >= TM_MAX else _round_up(max(B, 1), 8)
    B_pad = _round_up(B, TM)
    if B_pad != B:
        x = jnp.pad(x, ((0, B_pad - B), (0, 0)))

    out = pl.pallas_call(
        dqn_kernel,
        out_shape=jax.ShapeDtypeStruct((B_pad, H), jnp.float32),
        grid_spec=pltpu.PrefetchScalarGridSpec(
            num_scalar_prefetch=0,
            grid=(pl.cdiv(B_pad, TM),),
            in_specs=[
                pl.BlockSpec((TM, D), lambda i: (i, 0)),        # x tile marches over batch
                pl.BlockSpec((D, H), lambda i: (0, 0)),         # weights stay resident
                pl.BlockSpec((2, H, H), lambda i: (0, 0, 0)),
                pl.BlockSpec((3, H), lambda i: (0, 0)),
            ],
            out_specs=pl.BlockSpec((TM, H), lambda i: (i, 0)),  # lane-dense f32 output
        ),
        compiler_params=pltpu.CompilerParams(
            dimension_semantics=("parallel",),  # batch axis -> v7x megacore sharding
        ),
    )(x, w1, w23, b)

    # TODO(synk): for tiny-batch online inference, keep the ~35 KB of packed
    # weights resident across calls (cross-call prefetch pattern) instead of
    # re-DMAing them every invocation.
    return out[:B, :action_dim]


def init_params(key, state_dim, action_dim, hidden_dim=64):
    """PyTorch-style uniform(-1/sqrt(fan_in), 1/sqrt(fan_in)) init.

    Logical (f32) params: weights stored as (in_features, out_features) so the
    kernel computes y = x @ W + b; biases are 1-D (out_features,).
    """
    def linear(k, fan_in, fan_out):
        kw, kb = jax.random.split(k)
        bound = 1.0 / jnp.sqrt(float(fan_in))
        w = jax.random.uniform(kw, (fan_in, fan_out), jnp.float32, -bound, bound)
        b = jax.random.uniform(kb, (fan_out,), jnp.float32, -bound, bound)
        return w, b

    k1, k2, k3 = jax.random.split(key, 3)
    w1, b1 = linear(k1, state_dim, hidden_dim)
    w2, b2 = linear(k2, hidden_dim, hidden_dim)
    w3, b3 = linear(k3, hidden_dim, action_dim)
    return {"w1": w1, "b1": b1, "w2": w2, "b2": b2, "w3": w3, "b3": b3}


def pack_params(params):
    """Pad hidden/action dims to 128, cast weights to bf16, stack/pack arrays."""
    H = HIDDEN_PAD
    w1, w2, w3 = params["w1"], params["w2"], params["w3"]
    b1, b2, b3 = params["b1"], params["b2"], params["b3"]
    action_dim = w3.shape[1]

    def pad_w(w, rows, cols):
        return jnp.pad(w, ((0, rows - w.shape[0]), (0, cols - w.shape[1])))

    def pad_b(b):
        return jnp.pad(b, (0, H - b.shape[0]))

    w1p = pad_w(w1, w1.shape[0], H).astype(jnp.bfloat16)          # (D, 128)
    w2p = pad_w(w2, H, H).astype(jnp.bfloat16)                    # (128, 128)
    w3p = pad_w(w3, H, H).astype(jnp.bfloat16)                    # (128, 128)
    w23 = jnp.stack([w2p, w3p])                                   # (2, 128, 128)
    b = jnp.stack([pad_b(b1), pad_b(b2), pad_b(b3)]).astype(jnp.float32)  # (3, 128)
    return {"w1": w1p, "w23": w23, "b": b, "action_dim": action_dim}


def dqn_reference_f32(x, params):
    """Pure-f32 reference (exact PyTorch-module semantics)."""
    h = jnp.maximum(x @ params["w1"] + params["b1"], 0.0)
    h = jnp.maximum(h @ params["w2"] + params["b2"], 0.0)
    return h @ params["w3"] + params["b3"]


def dqn_reference_mixed(x, params):
    """Mirrors the kernel's mixed precision: bf16 operands, f32 accumulate."""
    bf, f32 = jnp.bfloat16, jnp.float32
    rd = lambda a: a.astype(bf).astype(f32)
    h = jnp.maximum(rd(x) @ rd(params["w1"]) + params["b1"], 0.0)
    h = jnp.maximum(rd(h) @ rd(params["w2"]) + params["b2"], 0.0)
    return rd(h) @ rd(params["w3"]) + params["b3"]


if __name__ == "__main__":
    # CartPole-like sizes: state_dim=4, action_dim=2, hidden_dim=64, batch=2.
    state_dim, action_dim, hidden_dim, batch = 4, 2, 64, 2

    key = jax.random.PRNGKey(0)
    k_params, k_x = jax.random.split(key)
    params = init_params(k_params, state_dim, action_dim, hidden_dim)
    packed = pack_params(params)
    x = jax.random.normal(k_x, (batch, state_dim), jnp.float32)

    out = jax.block_until_ready(dqn_forward(x, packed))
    assert out.shape == (batch, action_dim)

    # Tight check vs. the mixed-precision (bf16 operands / f32 accumulate) reference.
    ref_mixed = dqn_reference_mixed(x, params)
    assert jnp.allclose(out, ref_mixed, atol=1e-2, rtol=1e-2)

    # Loose sanity check vs. the exact f32 PyTorch-equivalent forward.
    ref_f32 = dqn_reference_f32(x, params)
    assert jnp.allclose(out, ref_f32, atol=5e-2, rtol=5e-2)

    # Also exercise a multi-tile (grid > 1) replay-buffer-sized batch.
    xb = jax.random.normal(jax.random.PRNGKey(1), (1024, state_dim), jnp.float32)
    outb = jax.block_until_ready(dqn_forward(xb, packed))
    assert outb.shape == (1024, action_dim)
    assert jnp.allclose(outb, dqn_reference_mixed(xb, params), atol=1e-2, rtol=1e-2)

    print("KERNEL_OK")
</pallas_src>

<mosaic_0001>
module attributes {stable_mosaic.version = 11 : i64} {
  func.func @dqn_kernel(%arg0: i32, %arg1: memref<8x4xf32, #tpu.memory_space<vmem>>, %arg2: memref<4x128xbf16, #tpu.memory_space<vmem>>, %arg3: memref<2x128x128xbf16, #tpu.memory_space<vmem>>, %arg4: memref<3x128xf32, #tpu.memory_space<vmem>>, %arg5: memref<8x128xf32, #tpu.memory_space<vmem>>) attributes {dimension_semantics = [#tpu.dimension_semantics<parallel>], iteration_bounds = array<i64: 1>, scalar_prefetch = 0 : i64, scratch_operands = 0 : i64, tpu.core_type = #tpu.core_type<tc>, window_params = [{transform_indices = @transform_0, window_bounds = array<i64: 8, 4>}, {pipeline_mode = #tpu.pipeline_mode<synchronous>, transform_indices = @transform_1, window_bounds = array<i64: 4, 128>}, {pipeline_mode = #tpu.pipeline_mode<synchronous>, transform_indices = @transform_2, window_bounds = array<i64: 2, 128, 128>}, {pipeline_mode = #tpu.pipeline_mode<synchronous>, transform_indices = @transform_3, window_bounds = array<i64: 3, 128>}, {transform_indices = @transform_4, window_bounds = array<i64: 8, 128>}]} {
    %c0 = arith.constant 0 : index
    %c0_0 = arith.constant 0 : index
    %0 = vector.load %arg1[%c0, %c0_0] : memref<8x4xf32, #tpu.memory_space<vmem>>, vector<8x4xf32>
    %1 = arith.truncf %0 : vector<8x4xf32> to vector<8x4xbf16>
    %c0_1 = arith.constant 0 : index
    %c0_2 = arith.constant 0 : index
    %2 = vector.load %arg2[%c0_1, %c0_2] : memref<4x128xbf16, #tpu.memory_space<vmem>>, vector<4x128xbf16>
    %cst = arith.constant dense<0.000000e+00> : vector<8x128xf32>
    %3 = tpu.matmul %1, %2, %cst {dimension_numbers = #tpu.dot_dimension_numbers<[1], [0], [0], [1], [0, 0, 1, 1], [], []>} : vector<8x4xbf16>, vector<4x128xbf16>, vector<8x128xf32> -> vector<8x128xf32>
    %c0_3 = arith.constant 0 : index
    %c0_4 = arith.constant 0 : index
    %4 = vector.load %arg4[%c0_3, %c0_4] : memref<3x128xf32, #tpu.memory_space<vmem>>, vector<1x128xf32>
    %5 = vector.broadcast %4 : vector<1x128xf32> to vector<8x128xf32>
    %6 = arith.addf %3, %5 : vector<8x128xf32>
    %cst_5 = arith.constant 0.000000e+00 : f32
    %7 = vector.broadcast %cst_5 : f32 to vector<8x128xf32>
    %8 = arith.maximumf %6, %7 : vector<8x128xf32>
    %9 = arith.truncf %8 : vector<8x128xf32> to vector<8x128xbf16>
    %c0_6 = arith.constant 0 : index
    %c0_7 = arith.constant 0 : index
    %c0_8 = arith.constant 0 : index
    %10 = vector.load %arg3[%c0_6, %c0_7, %c0_8] : memref<2x128x128xbf16, #tpu.memory_space<vmem>>, vector<1x128x128xbf16>
    %11 = vector.shape_cast %10 : vector<1x128x128xbf16> to vector<128x128xbf16>
    %cst_9 = arith.constant dense<0.000000e+00> : vector<8x128xf32>
    %12 = tpu.matmul %9, %11, %cst_9 {dimension_numbers = #tpu.dot_dimension_numbers<[1], [0], [0], [1], [0, 0, 1, 1], [], []>} : vector<8x128xbf16>, vector<128x128xbf16>, vector<8x128xf32> -> vector<8x128xf32>
    %c1 = arith.constant 1 : index
    %c0_10 = arith.constant 0 : index
    %13 = vector.load %arg4[%c1, %c0_10] : memref<3x128xf32, #tpu.memory_space<vmem>>, vector<1x128xf32>
    %14 = vector.broadcast %13 : vector<1x128xf32> to vector<8x128xf32>
    %15 = arith.addf %12, %14 : vector<8x128xf32>
    %cst_11 = arith.constant 0.000000e+00 : f32
    %16 = vector.broadcast %cst_11 : f32 to vector<8x128xf32>
    %17 = arith.maximumf %15, %16 : vector<8x128xf32>
    %18 = arith.truncf %17 : vector<8x128xf32> to vector<8x128xbf16>
    %c1_12 = arith.constant 1 : index
    %c0_13 = arith.constant 0 : index
    %c0_14 = arith.constant 0 : index
    %19 = vector.load %arg3[%c1_12, %c0_13, %c0_14] : memref<2x128x128xbf16, #tpu.memory_space<vmem>>, vector<1x128x128xbf16>
    %20 = vector.shape_cast %19 : vector<1x128x128xbf16> to vector<128x128xbf16>
    %cst_15 = arith.constant dense<0.000000e+00> : vector<8x128xf32>
    %21 = tpu.matmul %18, %20, %cst_15 {dimension_numbers = #tpu.dot_dimension_numbers<[1], [0], [0], [1], [0, 0, 1, 1], [], []>} : vector<8x128xbf16>, vector<128x128xbf16>, vector<8x128xf32> -> vector<8x128xf32>
    %c2 = arith.constant 2 : index
    %c0_16 = arith.constant 0 : index
    %22 = vector.load %arg4[%c2, %c0_16] : memref<3x128xf32, #tpu.memory_space<vmem>>, vector<1x128xf32>
    %23 = vector.broadcast %22 : vector<1x128xf32> to vector<8x128xf32>
    %24 = arith.addf %21, %23 : vector<8x128xf32>
    %c0_17 = arith.constant 0 : index
    %c0_18 = arith.constant 0 : index
    %25 = vector.load %arg5[%c0_17, %c0_18] : memref<8x128xf32, #tpu.memory_space<vmem>>, vector<8x128xf32>
    tpu.vector_store %arg5[%c0_17, %c0_18], %24 {strides = array<i32>} : memref<8x128xf32, #tpu.memory_space<vmem>>, vector<8x128xf32>,
    return
  }
  func.func @transform_0(%arg0: i32) -> (i32, i32) {
    %c0_i32 = arith.constant 0 : i32
    %c0_i32_0 = arith.constant 0 : i32
    return %arg0, %c0_i32 : i32, i32
  }
  func.func @transform_1(%arg0: i32) -> (i32, i32) {
    %c0_i32 = arith.constant 0 : i32
    %c0_i32_0 = arith.constant 0 : i32
    %c0_i32_1 = arith.constant 0 : i32
    return %c0_i32, %c0_i32_0 : i32, i32
  }
  func.func @transform_2(%arg0: i32) -> (i32, i32, i32) {
    %c0_i32 = arith.constant 0 : i32
    %c0_i32_0 = arith.constant 0 : i32
    %c0_i32_1 = arith.constant 0 : i32
    %c0_i32_2 = arith.constant 0 : i32
    return %c0_i32, %c0_i32_0, %c0_i32_1 : i32, i32, i32
  }
  func.func @transform_3(%arg0: i32) -> (i32, i32) {
    %c0_i32 = arith.constant 0 : i32
    %c0_i32_0 = arith.constant 0 : i32
    %c0_i32_1 = arith.constant 0 : i32
    return %c0_i32, %c0_i32_0 : i32, i32
  }
  func.func @transform_4(%arg0: i32) -> (i32, i32) {
    %c0_i32 = arith.constant 0 : i32
    %c0_i32_0 = arith.constant 0 : i32
    return %arg0, %c0_i32 : i32, i32
  }
}

</mosaic_0001>

<llo_original>
// kernel: tpu_custom_call.1
$region0: #{tpu_custom_call.1}
  #allocation0 [shape = 'u32[]', space=smem, size = 0x4, offset = 0x4, fixed_abs, tag = 'smem constant byte address 0x4 - core index']
  #allocation1 [shape = 'u32[144,128]{1,0:T(1,128)}', space=vmem, size = 0x12000, scoped, tag = 'internal scratch']
  %s0 = inlined_call_operand.vmem [shape: f32[8,4], index: 0, kind: input, shape index: {}]
  %s1 = inlined_call_operand.vmem [shape: bf16[4,128], index: 1, kind: input, shape index: {}]
  %s2 = inlined_call_operand.hbm [shape: bf16[2,128,128], index: 2, kind: input, shape index: {}]
  %s3 = inlined_call_operand.vmem [shape: f32[3,128], index: 3, kind: input, shape index: {}]
  %s4 = inlined_call_operand.hbm [shape: f32[8,128], index: 4, kind: output, shape index: {}]
  %s5 = sld [smem:[#allocation0]]
  $region30: #{tpu_custom_call.1} parent=0
    _
  %s7 = ssub.s32 1, %s5
  %s8 = scalar_select 0, %s7, %s5
  $region1: #{tpu_custom_call.1} parent=0
    #allocation2 [shape = 'u8[65536]{0}', space=vmem, size = 0x10000, scoped, tag = 'input window, operand 2, single buffered']
    #allocation3 [shape = 's32[1]{0}', space=sflag, size = 0x4, scoped, tag = 'scoped memory for tpu_custom_call.1']
    #allocation4 [shape = 's32[1]{0}', space=sflag, size = 0x4, scoped, tag = 'scoped memory for tpu_custom_call.1']
    #allocation5 [shape = 'u8[4096]{0}', space=vmem, size = 0x1000, scoped, tag = 'output window, operand 0, single buffered']
    %9 = vsyncpa [#allocation3], 0
    %10 = vsyncpa [#allocation4], 0
    // Predicated region
    $region2: #{tpu_custom_call.1} parent=1 // pred_check
      _
    $region3: #{tpu_custom_call.1} parent=1 // pred_check_branch
      %12 = sbr.rel (0) target = $region5
    $region4: #{tpu_custom_call.1} parent=1 // pred_region
      _
    $region5: #{tpu_custom_call.1} parent=1 // pred_fallthru
      _
    // Predicated region
    $region6: #{tpu_custom_call.1} parent=1 // pred_check
      _
    $region7: #{tpu_custom_call.1} parent=1 // pred_check_branch
      %14 = sbr.rel (0) target = $region9
    $region8: #{tpu_custom_call.1} parent=1 // pred_region
      _
    $region9: #{tpu_custom_call.1} parent=1 // pred_fallthru
      _
    // Predicated region
    $region10: #{tpu_custom_call.1} parent=1 // pred_check
      _
    $region11: #{tpu_custom_call.1} parent=1 // pred_check_branch
      %16 = sbr.rel (0) target = $region13
    $region12: #{tpu_custom_call.1} parent=1 // pred_region
      %s18 = ssub.s32 2048, 2048
      %19 = vsyncadd [#allocation3], %s18
      %s20 = sshll.u32 [#allocation2], 4
      %s21 = int_to_ptr.vmem [resolvable:$true] %s20
      %26 = dma.hbm_to_vmem [thread:$0]  %s2, 2048, %s21, [#allocation3], 64, 64, 4
    $region13: #{tpu_custom_call.1} parent=1 // pred_fallthru
      _
    // Predicated region
    $region14: #{tpu_custom_call.1} parent=1 // pred_check
      _
    $region15: #{tpu_custom_call.1} parent=1 // pred_check_branch
      %28 = sbr.rel (0) target = $region17
    $region16: #{tpu_custom_call.1} parent=1 // pred_region
      _
    $region17: #{tpu_custom_call.1} parent=1 // pred_fallthru
      _
    // Predicated region
    $region18: #{tpu_custom_call.1} parent=1 // pred_check
      _
    $region19: #{tpu_custom_call.1} parent=1 // pred_check_branch
      %30 = sbr.rel (0) target = $region21
    $region20: #{tpu_custom_call.1} parent=1 // pred_region
      %31 = dma.done [#allocation3], 2048
    $region21: #{tpu_custom_call.1} parent=1 // pred_fallthru
      _
    %v33 = vld [vmem:[%s0] sm:$0xff]
    %v34 = vpack.c.bf16 %v33, %v33
    %v35 = vld [vmem:[%s1] sm:$0x3]
    %v36 = vld [vmem:[%s3] sm:$0x1]
    %v37 = vlaneseq
    %v38 = vshrl.u32 %v37, 7
    %v39 = vsub.s32 0, %v38
    %v40 = vrot.slane %v36, %v39
    %vm41 = vcmask 31744
    %v43 = vsel %vm41, %v34, 0
    %vm45 = vcmask 1041408
    %v47 = vsel %vm45, %v35, 0
    %49 = vmatprep.subr.bf16.mxu0 0
    %50 = vmatpush1.bf16.msra.mxu0 %v47
    %51 = vmatprep.subr.bf16.mxu0 0
    %52 = vmatpush1.bf16.msra.mxu0 0
    %53 = vmatprep.subr.bf16.mxu0 0
    %54 = vmatpush1.bf16.msra.mxu0 0
    %55 = vmatprep.subr.bf16.mxu0 0
    %56 = vmatpush1.bf16.msra.mxu0 0
    %57 = vmatprep.subr.bf16.mxu0 0
    %58 = vmatpush1.bf16.msra.mxu0 0
    %59 = vmatprep.subr.bf16.mxu0 0
    %60 = vmatpush1.bf16.msra.mxu0 0
    %61 = vmatprep.subr.bf16.mxu0 0
    %62 = vmatpush1.bf16.msra.mxu0 0
    %63 = vmatprep.subr.bf16.mxu0 0
    %64 = vmatpush1.bf16.msra.mxu0 0
    %65 = vmatprep.subr.bf16.mxu0 0
    %66 = vmatpush1.bf16.msra.mxu0 0
    %67 = vmatprep.subr.bf16.mxu0 0
    %68 = vmatpush1.bf16.msra.mxu0 0
    %69 = vmatprep.subr.bf16.mxu0 0
    %70 = vmatpush1.bf16.msra.mxu0 0
    %71 = vmatprep.subr.bf16.mxu0 0
    %72 = vmatpush1.bf16.msra.mxu0 0
    %73 = vmatprep.subr.bf16.mxu0 0
    %74 = vmatpush1.bf16.msra.mxu0 0
    %75 = vmatprep.subr.bf16.mxu0 0
    %76 = vmatpush1.bf16.msra.mxu0 0
    %77 = vmatprep.subr.bf16.mxu0 0
    %78 = vmatpush1.bf16.msra.mxu0 0
    %79 = vmatprep.subr.bf16.mxu0 0
    %80 = vmatpush1.bf16.msra.mxu0 0
    %81 = vmatprep.mubr.bf16.mxu0 0
    %82 = vmatmul.mubr.bf16.gmra.mrb[0].mxu0 %v43
    %v83 = vpop.f32.mrb[0].mxu0
    %v84 = vadd.f32 %v40, %v83
    %v85 = vpop.f32.mrb[0].mxu0
    %v86 = vpop.f32.mrb[0].mxu0
    %v87 = vpop.f32.mrb[0].mxu0
    %88 = vdwg.mxu0
    %v89 = vmax.f32 %v84, 0.0
    %v90 = vpack.c.bf16 %v89, %v89
    %v91 = vld [vmem:[#allocation2] sm:$0xf]
    %v92 = vld [vmem:[#allocation2 + $0x4] sm:$0xf]
    %v93 = vld [vmem:[#allocation2 + $0x8] sm:$0xf]
    %v94 = vld [vmem:[#allocation2 + $0xc] sm:$0xf]
    %v95 = vld [vmem:[#allocation2 + $0x10] sm:$0xf]
    %v96 = vld [vmem:[#allocation2 + $0x14] sm:$0xf]
    %v97 = vld [vmem:[#allocation2 + $0x18] sm:$0xf]
    %v98 = vld [vmem:[#allocation2 + $0x1c] sm:$0xf]
    %v99 = vld [vmem:[#allocation2 + $0x20] sm:$0xf]
    %v100 = vld [vmem:[#allocation2 + $0x24] sm:$0xf]
    %v101 = vld [vmem:[#allocation2 + $0x28] sm:$0xf]
    %v102 = vld [vmem:[#allocation2 + $0x2c] sm:$0xf]
    %v103 = vld [vmem:[#allocation2 + $0x30] sm:$0xf]
    %v104 = vld [vmem:[#allocation2 + $0x34] sm:$0xf]
    %v105 = vld [vmem:[#allocation2 + $0x38] sm:$0xf]
    %v106 = vld [vmem:[#allocation2 + $0x3c] sm:$0xf]
    %v107 = vld [vmem:[%s3 + $0x1] sm:$0x1]
    %v108 = vlaneseq
    %v109 = vshrl.u32 %v108, 7
    %v110 = vsub.s32 0, %v109
    %v111 = vrot.slane %v107, %v110
    %v128 = vunpack.c.l.b16 %v91
    %v129 = vunpack.c.l.b16 %v92
    %v130 = vunpack.c.l.b16 %v93
    %v131 = vunpack.c.l.b16 %v94
    %v132 = vunpack.c.l.b16 %v95
    %v133 = vunpack.c.l.b16 %v96
    %v134 = vunpack.c.l.b16 %v97
    %v135 = vunpack.c.l.b16 %v98
    %v136 = vunpack.c.l.b16 %v99
    %v137 = vunpack.c.l.b16 %v100
    %v138 = vunpack.c.l.b16 %v101
    %v139 = vunpack.c.l.b16 %v102
    %v140 = vunpack.c.l.b16 %v103
    %v141 = vunpack.c.l.b16 %v104
    %v142 = vunpack.c.l.b16 %v105
    %v143 = vunpack.c.l.b16 %v106
    %v144 = vpack.c.b16 %v129, %v128
    %v145 = vpack.c.b16 %v131, %v130
    %v146 = vpack.c.b16 %v133, %v132
    %v147 = vpack.c.b16 %v135, %v134
    %v148 = vpack.c.b16 %v137, %v136
    %v149 = vpack.c.b16 %v139, %v138
    %v150 = vpack.c.b16 %v141, %v140
    %v151 = vpack.c.b16 %v143, %v142
    %160 = vmatprep.subr.bf16.mxu0 0
    %161 = vmatpush1.bf16.msra.mxu0 %v144
    %162 = vmatprep.subr.bf16.mxu0 0
    %163 = vmatpush1.bf16.msra.mxu0 %v145
    %164 = vmatprep.subr.bf16.mxu0 0
    %165 = vmatpush1.bf16.msra.mxu0 %v146
    %166 = vmatprep.subr.bf16.mxu0 0
    %167 = vmatpush1.bf16.msra.mxu0 %v147
    %168 = vmatprep.subr.bf16.mxu0 0
    %169 = vmatpush1.bf16.msra.mxu0 %v148
    %170 = vmatprep.subr.bf16.mxu0 0
    %171 = vmatpush1.bf16.msra.mxu0 %v149
    %172 = vmatprep.subr.bf16.mxu0 0
    %173 = vmatpush1.bf16.msra.mxu0 %v150
    %174 = vmatprep.subr.bf16.mxu0 0
    %175 = vmatpush1.bf16.msra.mxu0 %v151
    %176 = vmatprep.subr.bf16.mxu0 0
    %177 = vmatpush1.bf16.msra.mxu0 0
    %178 = vmatprep.subr.bf16.mxu0 0
    %179 = vmatpush1.bf16.msra.mxu0 0
    %180 = vmatprep.subr.bf16.mxu0 0
    %181 = vmatpush1.bf16.msra.mxu0 0
    %182 = vmatprep.subr.bf16.mxu0 0
    %183 = vmatpush1.bf16.msra.mxu0 0
    %184 = vmatprep.subr.bf16.mxu0 0
    %185 = vmatpush1.bf16.msra.mxu0 0
    %186 = vmatprep.subr.bf16.mxu0 0
    %187 = vmatpush1.bf16.msra.mxu0 0
    %188 = vmatprep.subr.bf16.mxu0 0
    %189 = vmatpush1.bf16.msra.mxu0 0
    %190 = vmatprep.subr.bf16.mxu0 0
    %191 = vmatpush1.bf16.msra.mxu0 0
    %192 = vmatprep.mubr.bf16.mxu0 0
    %193 = vmatmul.mubr.bf16.gmra.mrb[0].mxu0 %v90
    %v194 = vpop.f32.mrb[0].mxu0
    %v195 = vadd.f32 %v111, %v194
    %v196 = vpop.f32.mrb[0].mxu0
    %v197 = vpop.f32.mrb[0].mxu0
    %v198 = vpop.f32.mrb[0].mxu0
    %199 = vdwg.mxu0
    %v200 = vmax.f32 %v195, 0.0
    %v201 = vpack.c.bf16 %v200, %v200
    %s202 = scalar_lea.vmem [#allocation2], 64
    %v203 = vld [vmem:[%s202] sm:$0xf]
    %v204 = vld [vmem:[%s202 + $0x4] sm:$0xf]
    %v205 = vld [vmem:[%s202 + $0x8] sm:$0xf]
    %v206 = vld [vmem:[%s202 + $0xc] sm:$0xf]
    %v207 = vld [vmem:[%s202 + $0x10] sm:$0xf]
    %v208 = vld [vmem:[%s202 + $0x14] sm:$0xf]
    %v209 = vld [vmem:[%s202 + $0x18] sm:$0xf]
    %v210 = vld [vmem:[%s202 + $0x1c] sm:$0xf]
    %v211 = vld [vmem:[%s202 + $0x20] sm:$0xf]
    %v212 = vld [vmem:[%s202 + $0x24] sm:$0xf]
    %v213 = vld [vmem:[%s202 + $0x28] sm:$0xf]
    %v214 = vld [vmem:[%s202 + $0x2c] sm:$0xf]
    %v215 = vld [vmem:[%s202 + $0x30] sm:$0xf]
    %v216 = vld [vmem:[%s202 + $0x34] sm:$0xf]
    %v217 = vld [vmem:[%s202 + $0x38] sm:$0xf]
    %v218 = vld [vmem:[%s202 + $0x3c] sm:$0xf]
    %v219 = vld [vmem:[%s3 + $0x2] sm:$0x1]
    %v220 = vlaneseq
    %v221 = vshrl.u32 %v220, 7
    %v222 = vsub.s32 0, %v221
    %v223 = vrot.slane %v219, %v222
    %v240 = vunpack.c.l.b16 %v203
    %v241 = vunpack.c.l.b16 %v204
    %v242 = vunpack.c.l.b16 %v205
    %v243 = vunpack.c.l.b16 %v206
    %v244 = vunpack.c.l.b16 %v207
    %v245 = vunpack.c.l.b16 %v208
    %v246 = vunpack.c.l.b16 %v209
    %v247 = vunpack.c.l.b16 %v210
    %v248 = vunpack.c.l.b16 %v211
    %v249 = vunpack.c.l.b16 %v212
    %v250 = vunpack.c.l.b16 %v213
    %v251 = vunpack.c.l.b16 %v214
    %v252 = vunpack.c.l.b16 %v215
    %v253 = vunpack.c.l.b16 %v216
    %v254 = vunpack.c.l.b16 %v217
    %v255 = vunpack.c.l.b16 %v218
    %v256 = vpack.c.b16 %v241, %v240
    %v257 = vpack.c.b16 %v243, %v242
    %v258 = vpack.c.b16 %v245, %v244
    %v259 = vpack.c.b16 %v247, %v246
    %v260 = vpack.c.b16 %v249, %v248
    %v261 = vpack.c.b16 %v251, %v250
    %v262 = vpack.c.b16 %v253, %v252
    %v263 = vpack.c.b16 %v255, %v254
    %272 = vmatprep.subr.bf16.mxu0 0
    %273 = vmatpush1.bf16.msra.mxu0 %v256
    %274 = vmatprep.subr.bf16.mxu0 0
    %275 = vmatpush1.bf16.msra.mxu0 %v257
    %276 = vmatprep.subr.bf16.mxu0 0
    %277 = vmatpush1.bf16.msra.mxu0 %v258
    %278 = vmatprep.subr.bf16.mxu0 0
    %279 = vmatpush1.bf16.msra.mxu0 %v259
    %280 = vmatprep.subr.bf16.mxu0 0
    %281 = vmatpush1.bf16.msra.mxu0 %v260
    %282 = vmatprep.subr.bf16.mxu0 0
    %283 = vmatpush1.bf16.msra.mxu0 %v261
    %284 = vmatprep.subr.bf16.mxu0 0
    %285 = vmatpush1.bf16.msra.mxu0 %v262
    %286 = vmatprep.subr.bf16.mxu0 0
    %287 = vmatpush1.bf16.msra.mxu0 %v263
    %288 = vmatprep.subr.bf16.mxu0 0
    %289 = vmatpush1.bf16.msra.mxu0 0
    %290 = vmatprep.subr.bf16.mxu0 0
    %291 = vmatpush1.bf16.msra.mxu0 0
    %292 = vmatprep.subr.bf16.mxu0 0
    %293 = vmatpush1.bf16.msra.mxu0 0
    %294 = vmatprep.subr.bf16.mxu0 0
    %295 = vmatpush1.bf16.msra.mxu0 0
    %296 = vmatprep.subr.bf16.mxu0 0
    %297 = vmatpush1.bf16.msra.mxu0 0
    %298 = vmatprep.subr.bf16.mxu0 0
    %299 = vmatpush1.bf16.msra.mxu0 0
    %300 = vmatprep.subr.bf16.mxu0 0
    %301 = vmatpush1.bf16.msra.mxu0 0
    %302 = vmatprep.subr.bf16.mxu0 0
    %303 = vmatpush1.bf16.msra.mxu0 0
    %304 = vmatprep.mubr.bf16.mxu0 0
    %305 = vmatmul.mubr.bf16.gmra.mrb[0].mxu0 %v201
    %v306 = vpop.f32.mrb[0].mxu0
    %v307 = vadd.f32 %v223, %v306
    %v308 = vpop.f32.mrb[0].mxu0
    %v309 = vpop.f32.mrb[0].mxu0
    %v310 = vpop.f32.mrb[0].mxu0
    %311 = vdwg.mxu0
    %312 = vst [vmem:[#allocation5] sm:$0xff] %v307
    // Predicated region
    $region22: #{tpu_custom_call.1} parent=1 // pred_check
      _
    $region23: #{tpu_custom_call.1} parent=1 // pred_check_branch
      %314 = sbr.rel (0) target = $region25
    $region24: #{tpu_custom_call.1} parent=1 // pred_region
      %s316 = ssub.s32 128, 128
      %317 = vsyncadd [#allocation4], %s316
      %s319 = sshll.u32 [#allocation5], 4
      %s320 = int_to_ptr.vmem [resolvable:$true] %s319
      %322 = dma.vmem_to_hbm [thread:$0]  %s320, 128, %s4, [#allocation4]
    $region25: #{tpu_custom_call.1} parent=1 // pred_fallthru
      _
    // Predicated region
    $region26: #{tpu_custom_call.1} parent=1 // pred_check
      _
    $region27: #{tpu_custom_call.1} parent=1 // pred_check_branch
      %324 = sbr.rel (0) target = $region29
    $region28: #{tpu_custom_call.1} parent=1 // pred_region
      %325 = dma.done [#allocation4], 128
    $region29: #{tpu_custom_call.1} parent=1 // pred_fallthru
      _
    %326 = vsyncpa [#allocation3], 1
    %327 = vsyncpa [#allocation4], 1

</llo_original>
